<compile_context>
chip_gen: v7x
topology: tpu7x:2x2x1
jax: 0.10.0
libtpu: 0.0.40
codegen_flags: <defaults>
</compile_context>

<pallas_src>
import math

import jax
import jax.numpy as jnp
from jax.experimental import pallas as pl
from jax.experimental.pallas import tpu as pltpu

LAYERNORM_EPSILON = 1e-12


# ---------------------------------------------------------------------------
# In-kernel helpers (pure jnp, traced inside the Pallas kernel bodies)
# ---------------------------------------------------------------------------
def _erf(x):
    # Abramowitz & Stegun 7.1.26 rational approximation (|err| < 1.5e-7).
    # The divide is routed to the EUP via pl.reciprocal(approx=True).
    a1, a2, a3, a4, a5 = 0.254829592, -0.284496736, 1.421413741, -1.453152027, 1.061405429
    p = 0.3275911
    sign = jnp.where(x >= 0.0, 1.0, -1.0)
    ax = jnp.abs(x)
    t = pl.reciprocal(1.0 + p * ax, approx=True)
    poly = ((((a5 * t + a4) * t + a3) * t + a2) * t + a1) * t
    return sign * (1.0 - poly * jnp.exp(-ax * ax))


def _gelu_exact(x):
    # F.gelu default ("exact", erf-based), evaluated in f32.
    return 0.5 * x * (1.0 + _erf(x * (1.0 / math.sqrt(2.0))))


def _layernorm(x, gamma, beta, eps):
    mean = jnp.mean(x, axis=-1, keepdims=True)
    var = jnp.mean((x - mean) ** 2, axis=-1, keepdims=True)
    return (x - mean) * jax.lax.rsqrt(var + eps) * gamma + beta


# ---------------------------------------------------------------------------
# Kernel A: fused QKV projection (lane-dense (ts, 3H) GEMM, full K = H depth)
# ---------------------------------------------------------------------------
def qkv_proj_kernel(x_ref, wqkv_ref, bqkv_ref, qkv_ref):
    x = x_ref[0]                                                     # (ts, H) bf16
    y = jnp.dot(x, wqkv_ref[...], preferred_element_type=jnp.float32)
    qkv_ref[0] = (y + bqkv_ref[...]).astype(qkv_ref.dtype)          # (ts, 3H) bf16


# ---------------------------------------------------------------------------
# Kernel B: attention (pre-projected head-major Q/K/V) + residual + LN + MLP
# ---------------------------------------------------------------------------
def attn_mlp_kernel(
    x_ref,       # (1, tq, H)      residual-path input (f32)
    q_ref,       # (1, NH, tq, hd) bf16, 1/sqrt(hd) pre-folded
    k_ref,       # (1, NH, S,  hd) bf16
    v_ref,       # (1, NH, S,  hd) bf16
    mb_ref,      # (1, 1, S)       additive key-mask bias ((1-mask)*-1e4)
    wo_ref,      # (H, H)  bf16    attention out-projection (unsplit)
    bo_ref,      # (1, H)  f32
    g1_ref, be1_ref,   # (1, H)   attention LayerNorm
    w1_ref,      # (H, I)  bf16    MLP intermediate
    b1_ref,      # (1, I)  f32
    w2_ref,      # (I, H)  bf16    MLP output
    b2_ref,      # (1, H)  f32
    g2_ref, be2_ref,   # (1, H)   MLP LayerNorm
    out_ref,     # (1, tq, H)
):
    NH = q_ref.shape[1]

    x = x_ref[0].astype(jnp.float32)                                 # (tq, H)
    q = q_ref[0]                                                     # (NH, tq, hd)
    k = k_ref[0]                                                     # (NH, S,  hd)
    v = v_ref[0]

    # ---- scores + masked softmax (f32); normalization deferred past PV ----
    s = jnp.einsum('hqd,hkd->hqk', q, k,
                   preferred_element_type=jnp.float32)               # (NH, tq, S)
    s = s + mb_ref[0]                                                # key mask, added once
    m = jnp.max(s, axis=-1, keepdims=True)
    p = jnp.exp(s - m)
    l = jnp.sum(p, axis=-1, keepdims=True)                           # (NH, tq, 1)

    # ---- attention context; normalize the small (NH,tq,hd) tensor ----
    ctx = jnp.einsum('hqk,hkd->hqd', p.astype(jnp.bfloat16), v,
                     preferred_element_type=jnp.float32)             # (NH, tq, hd)
    ctx = (ctx * pl.reciprocal(l, approx=True)).astype(jnp.bfloat16)

    # ---- merge heads along the lane dim (one cheap relayout), then a single
    #      lane-dense (tq,H)@(H,H) out-projection with full MXU depth ----
    ctx2d = jnp.concatenate([ctx[h] for h in range(NH)], axis=-1)    # (tq, H) bf16
    attn = jnp.dot(ctx2d, wo_ref[...],
                   preferred_element_type=jnp.float32) + bo_ref[...]

    # dropout skipped (deterministic=True)
    y1 = _layernorm(attn + x, g1_ref[...], be1_ref[...], LAYERNORM_EPSILON)

    # ---- MLP ----
    h1 = jnp.dot(y1.astype(jnp.bfloat16), w1_ref[...],
                 preferred_element_type=jnp.float32) + b1_ref[...]   # (tq, I)
    h1 = _gelu_exact(h1)
    h2 = jnp.dot(h1.astype(jnp.bfloat16), w2_ref[...],
                 preferred_element_type=jnp.float32) + b2_ref[...]   # (tq, H)
    # dropout skipped (deterministic=True)
    y2 = _layernorm(h2 + y1, g2_ref[...], be2_ref[...], LAYERNORM_EPSILON)

    out_ref[0] = y2.astype(out_ref.dtype)


# ---------------------------------------------------------------------------
# Wrapper
# ---------------------------------------------------------------------------
def _vmem_capacity_bytes():
    try:
        return int(pltpu.get_tpu_info().vmem_capacity_bytes)
    except Exception:
        return 64 * 1024 * 1024          # conservative default (v7x physical VMEM)


def _largest_tile(S, cap):
    # Largest divisor of S that is a multiple of 8 and <= cap; else S itself.
    best = 0
    t = 8
    while t <= min(S, cap):
        if S % t == 0:
            best = t
        t += 8
    return best if best else S


def transformer_layer(layer_input, input_mask, kparams, *, num_heads, q_block=None):
    B, S, H = layer_input.shape
    I = kparams["w1"].shape[1]
    NH = num_heads
    hd = H // NH
    assert NH * hd == H

    vmem_cap = _vmem_capacity_bytes()
    # Generation-aware scoped-VMEM budget (≈109 MiB on 128 MiB parts, ≈54 MiB on v7x).
    vmem_limit = int(0.85 * vmem_cap)

    def inv(arr):
        # Grid-invariant operand (weights / biases): block index never changes,
        # so single-buffer it to halve its VMEM residency.
        n = arr.ndim
        return pl.BlockSpec(arr.shape, lambda i, j, _n=n: (0,) * _n,
                            pipeline_mode=pl.Buffered(1))

    # ------------------- kernel A: fused QKV projection -------------------
    ts = _largest_tile(S, 512)
    x_bf16 = layer_input.astype(jnp.bfloat16)        # halve the projection DMA
    qkv = pl.pallas_call(
        qkv_proj_kernel,
        out_shape=jax.ShapeDtypeStruct((B, S, 3 * H), jnp.bfloat16),
        grid_spec=pltpu.PrefetchScalarGridSpec(
            num_scalar_prefetch=0,
            grid=(B, S // ts),
            in_specs=[
                pl.BlockSpec((1, ts, H), lambda b, si: (b, si, 0)),
                inv(kparams["wqkv"]),
                inv(kparams["bqkv"]),
            ],
            out_specs=pl.BlockSpec((1, ts, 3 * H), lambda b, si: (b, si, 0)),
        ),
        compiler_params=pltpu.CompilerParams(
            dimension_semantics=("parallel", "parallel"),
            vmem_limit_bytes=vmem_limit,
        ),
    )(x_bf16, kparams["wqkv"], kparams["bqkv"])

    # Head split to (B, NH, S, hd): pure bf16 layout transform in XLA.
    qkv = qkv.reshape(B, S, 3, NH, hd).transpose(2, 0, 3, 1, 4)
    q_h, k_h, v_h = qkv[0], qkv[1], qkv[2]

    # (1 - mask) * -10000, shaped (B, 1, S) for per-batch blocking.
    mask_bias = ((1.0 - input_mask.astype(jnp.float32)) * -10000.0)[:, None, :]

    # ------------------- query-tile selection for kernel B -----------------
    def est_vmem(tq):
        w = 2 * (H * H + H * I + I * H) + 4 * (6 * H + I)            # single-buffered weights
        io = (4 * tq * H * 4                                         # x + out tiles (x2 bufs)
              + 2 * NH * tq * hd * 2                                 # q tile
              + 4 * NH * S * hd * 2                                  # k + v (x2 bufs)
              + 2 * S * 4)                                           # mask
        act = (2 * NH * tq * S * 4                                   # scores + probs (f32)
               + NH * tq * hd * 4 + tq * H * 2                       # ctx + merged ctx
               + 2 * tq * I * 4                                      # MLP intermediate
               + 6 * tq * H * 4)                                     # attn/y1/h2/y2 temporaries
        return w + io + act

    if q_block is None:
        tq_cap = 512 if vmem_cap >= 96 * 1024 * 1024 else 256
        cands = [t for t in range(8, min(S, tq_cap) + 1, 8) if S % t == 0] or [S]
        tq = cands[0]
        for t in cands:                              # ascending: keep largest that fits
            if est_vmem(t) <= 0.70 * vmem_cap:
                tq = t
    else:
        tq = q_block
    assert S % tq == 0, "q_block must divide the sequence length"
    nq = S // tq
    # TODO(synk): for very long S (>= ~2048) a kv-tile loop with online softmax would
    # cap the (NH, tq, S) score residency independent of S; tq shrinking covers the rest.

    in_specs = [
        pl.BlockSpec((1, tq, H), lambda b, qi: (b, qi, 0)),           # x (residual tile)
        pl.BlockSpec((1, NH, tq, hd), lambda b, qi: (b, 0, qi, 0)),   # q tile
        pl.BlockSpec((1, NH, S, hd), lambda b, qi: (b, 0, 0, 0)),     # k (refetched only per b)
        pl.BlockSpec((1, NH, S, hd), lambda b, qi: (b, 0, 0, 0)),     # v
        pl.BlockSpec((1, 1, S), lambda b, qi: (b, 0, 0)),             # mask bias
        inv(kparams["wo"]), inv(kparams["bo"]),
        inv(kparams["g1"]), inv(kparams["be1"]),
        inv(kparams["w1"]), inv(kparams["b1"]),
        inv(kparams["w2"]), inv(kparams["b2"]),
        inv(kparams["g2"]), inv(kparams["be2"]),
    ]

    return pl.pallas_call(
        attn_mlp_kernel,
        out_shape=jax.ShapeDtypeStruct((B, S, H), layer_input.dtype),
        grid_spec=pltpu.PrefetchScalarGridSpec(
            num_scalar_prefetch=0,
            grid=(B, nq),
            in_specs=in_specs,
            out_specs=pl.BlockSpec((1, tq, H), lambda b, qi: (b, qi, 0)),
        ),
        compiler_params=pltpu.CompilerParams(
            # every (b, qi) step is independent -> both axes parallel (uses both
            # v7x TensorCores even when B == 1).
            dimension_semantics=("parallel", "parallel"),
            vmem_limit_bytes=vmem_limit,
        ),
    )(
        layer_input, q_h, k_h, v_h, mask_bias,
        kparams["wo"], kparams["bo"],
        kparams["g1"], kparams["be1"],
        kparams["w1"], kparams["b1"],
        kparams["w2"], kparams["b2"],
        kparams["g2"], kparams["be2"],
    )


# ---------------------------------------------------------------------------
# Parameter prep: math-layout f32 params -> kernel layout (bf16 weights,
# attention scale folded into the Q columns of the fused QKV projection).
# ---------------------------------------------------------------------------
def prepare_kernel_params(p, num_heads):
    H = p["wo"].shape[0]
    hd = H // num_heads
    scale = 1.0 / math.sqrt(hd)
    scale_vec = jnp.concatenate([jnp.full((H,), scale, jnp.float32),
                                 jnp.ones((2 * H,), jnp.float32)])
    return {
        "wqkv": (p["wqkv"] * scale_vec[None, :]).astype(jnp.bfloat16),      # (H, 3H)
        "bqkv": (p["bqkv"].reshape(1, 3 * H) * scale_vec[None, :]).astype(jnp.float32),
        "wo": p["wo"].astype(jnp.bfloat16), "bo": p["bo"].astype(jnp.float32),
        "g1": p["g1"].astype(jnp.float32), "be1": p["be1"].astype(jnp.float32),
        "w1": p["w1"].astype(jnp.bfloat16), "b1": p["b1"].astype(jnp.float32),
        "w2": p["w2"].astype(jnp.bfloat16), "b2": p["b2"].astype(jnp.float32),
        "g2": p["g2"].astype(jnp.float32), "be2": p["be2"].astype(jnp.float32),
    }


# ---------------------------------------------------------------------------
# Pure-JAX f32 reference (for correctness check)
# ---------------------------------------------------------------------------
def transformer_layer_ref(x, input_mask, params, *, num_heads):
    B, S, H = x.shape
    hd = H // num_heads
    mask_bias = ((1.0 - input_mask.astype(jnp.float32)) * -10000.0)[:, None, None, :]

    qkv = x @ params["wqkv"] + params["bqkv"]
    q, k, v = jnp.split(qkv, 3, axis=-1)

    def split_heads(t):
        return t.reshape(B, S, num_heads, hd).transpose(0, 2, 1, 3)

    q, k, v = map(split_heads, (q, k, v))
    scores = (q / math.sqrt(hd)) @ k.transpose(0, 1, 3, 2) + mask_bias
    p = jax.nn.softmax(scores, axis=-1)
    ctx = (p @ v).transpose(0, 2, 1, 3).reshape(B, S, H)

    attn_out = ctx @ params["wo"] + params["bo"]
    y1 = _layernorm(attn_out + x, params["g1"], params["be1"], LAYERNORM_EPSILON)

    inter = jax.nn.gelu(y1 @ params["w1"] + params["b1"], approximate=False)
    mlp_out = inter @ params["w2"] + params["b2"]
    return _layernorm(mlp_out + y1, params["g2"], params["be2"], LAYERNORM_EPSILON)


# ---------------------------------------------------------------------------
# Deterministic parameter init (initializer_fn ~ N(0, 0.02); biases zeroed,
# LayerNorm affine at PyTorch defaults gamma=1, beta=0)
# ---------------------------------------------------------------------------
def init_params(key, hidden_size, intermediate_size):
    H, I = hidden_size, intermediate_size
    std = 0.02
    k1, k2, k3, k4 = jax.random.split(key, 4)
    # PyTorch orientation [out, in], then transpose for x @ W usage.
    wqkv_pt = std * jax.random.normal(k1, (3 * H, H), jnp.float32)
    wo_pt = std * jax.random.normal(k2, (H, H), jnp.float32)
    w1_pt = std * jax.random.normal(k3, (I, H), jnp.float32)
    w2_pt = std * jax.random.normal(k4, (H, I), jnp.float32)
    return {
        "wqkv": wqkv_pt.T, "bqkv": jnp.zeros((1, 3 * H), jnp.float32),
        "wo": wo_pt.T, "bo": jnp.zeros((1, H), jnp.float32),
        "g1": jnp.ones((1, H), jnp.float32), "be1": jnp.zeros((1, H), jnp.float32),
        "w1": w1_pt.T, "b1": jnp.zeros((1, I), jnp.float32),
        "w2": w2_pt.T, "b2": jnp.zeros((1, H), jnp.float32),
        "g2": jnp.ones((1, H), jnp.float32), "be2": jnp.zeros((1, H), jnp.float32),
    }


if __name__ == "__main__":
    B, S, H, NH, I = 2, 16, 32, 4, 64
    TQ = 8   # query tile: exercises the (B, S//tq) grid at small scale

    key = jax.random.PRNGKey(0)
    kx, kp = jax.random.split(key)
    layer_input = jax.random.normal(kx, (B, S, H), jnp.float32)
    lengths = jnp.array([16, 10])
    input_mask = (jnp.arange(S)[None, :] < lengths[:, None]).astype(jnp.float32)

    params = init_params(kp, H, I)
    kparams = prepare_kernel_params(params, NH)

    out = transformer_layer(layer_input, input_mask, kparams, num_heads=NH, q_block=TQ)
    out = jax.block_until_ready(out)

    ref = transformer_layer_ref(layer_input, input_mask, params, num_heads=NH)
    assert out.shape == (B, S, H)
    max_err = float(jnp.max(jnp.abs(out - ref)))
    # bf16 MXU operands (f32 accumulation) + approx EUP reciprocals vs f32 reference.
    assert jnp.allclose(out, ref, atol=2e-2, rtol=2e-2), (
        f"kernel mismatch vs JAX reference (max abs err {max_err})")

    # TODO(synk): dropout is omitted (forward called with deterministic=True / eval mode).
    print("KERNEL_OK")
</pallas_src>

<mosaic_0001>
module attributes {stable_mosaic.version = 11 : i64} {
  func.func @qkv_proj_kernel(%arg0: i32, %arg1: i32, %arg2: memref<1x16x32xbf16, #tpu.memory_space<vmem>>, %arg3: memref<32x96xbf16, #tpu.memory_space<vmem>>, %arg4: memref<1x96xf32, #tpu.memory_space<vmem>>, %arg5: memref<1x16x96xbf16, #tpu.memory_space<vmem>>) attributes {dimension_semantics = [#tpu.dimension_semantics<parallel>, #tpu.dimension_semantics<parallel>], iteration_bounds = array<i64: 2, 1>, scalar_prefetch = 0 : i64, scratch_operands = 0 : i64, tpu.core_type = #tpu.core_type<tc>, window_params = [{transform_indices = @transform_0, window_bounds = array<i64: 1, 16, 32>}, {pipeline_mode = #tpu.pipeline_mode<synchronous>, transform_indices = @transform_1, window_bounds = array<i64: 32, 96>}, {pipeline_mode = #tpu.pipeline_mode<synchronous>, transform_indices = @transform_2, window_bounds = array<i64: 1, 96>}, {transform_indices = @transform_3, window_bounds = array<i64: 1, 16, 96>}]} {
    %c0 = arith.constant 0 : index
    %c0_0 = arith.constant 0 : index
    %c0_1 = arith.constant 0 : index
    %0 = vector.load %arg2[%c0, %c0_0, %c0_1] : memref<1x16x32xbf16, #tpu.memory_space<vmem>>, vector<1x16x32xbf16>
    %1 = vector.shape_cast %0 : vector<1x16x32xbf16> to vector<16x32xbf16>
    %c0_2 = arith.constant 0 : index
    %c0_3 = arith.constant 0 : index
    %2 = vector.load %arg3[%c0_2, %c0_3] : memref<32x96xbf16, #tpu.memory_space<vmem>>, vector<32x96xbf16>
    %cst = arith.constant dense<0.000000e+00> : vector<16x96xf32>
    %3 = tpu.matmul %1, %2, %cst {dimension_numbers = #tpu.dot_dimension_numbers<[1], [0], [0], [1], [0, 0, 1, 1], [], []>} : vector<16x32xbf16>, vector<32x96xbf16>, vector<16x96xf32> -> vector<16x96xf32>
    %c0_4 = arith.constant 0 : index
    %c0_5 = arith.constant 0 : index
    %4 = vector.load %arg4[%c0_4, %c0_5] : memref<1x96xf32, #tpu.memory_space<vmem>>, vector<1x96xf32>
    %5 = vector.broadcast %4 : vector<1x96xf32> to vector<16x96xf32>
    %6 = arith.addf %3, %5 : vector<16x96xf32>
    %7 = arith.truncf %6 : vector<16x96xf32> to vector<16x96xbf16>
    %c0_6 = arith.constant 0 : index
    %c0_7 = arith.constant 0 : index
    %c0_8 = arith.constant 0 : index
    %8 = vector.load %arg5[%c0_6, %c0_7, %c0_8] : memref<1x16x96xbf16, #tpu.memory_space<vmem>>, vector<1x16x96xbf16>
    %9 = vector.shape_cast %8 : vector<1x16x96xbf16> to vector<16x96xbf16>
    %10 = vector.shape_cast %7 : vector<16x96xbf16> to vector<1x16x96xbf16>
    tpu.vector_store %arg5[%c0_6, %c0_7, %c0_8], %10 {strides = array<i32>} : memref<1x16x96xbf16, #tpu.memory_space<vmem>>, vector<1x16x96xbf16>,
    return
  }
  func.func @transform_0(%arg0: i32, %arg1: i32) -> (i32, i32, i32) {
    %c0_i32 = arith.constant 0 : i32
    %c0_i32_0 = arith.constant 0 : i32
    return %arg0, %arg1, %c0_i32 : i32, i32, i32
  }
  func.func @transform_1(%arg0: i32, %arg1: i32) -> (i32, i32) {
    %c0_i32 = arith.constant 0 : i32
    %c0_i32_0 = arith.constant 0 : i32
    %c0_i32_1 = arith.constant 0 : i32
    return %c0_i32, %c0_i32_0 : i32, i32
  }
  func.func @transform_2(%arg0: i32, %arg1: i32) -> (i32, i32) {
    %c0_i32 = arith.constant 0 : i32
    %c0_i32_0 = arith.constant 0 : i32
    %c0_i32_1 = arith.constant 0 : i32
    return %c0_i32, %c0_i32_0 : i32, i32
  }
  func.func @transform_3(%arg0: i32, %arg1: i32) -> (i32, i32, i32) {
    %c0_i32 = arith.constant 0 : i32
    %c0_i32_0 = arith.constant 0 : i32
    return %arg0, %arg1, %c0_i32 : i32, i32, i32
  }
}

</mosaic_0001>

<llo_original>
// kernel: tpu_custom_call.1
$region0: #{tpu_custom_call.1}
  #allocation0 [shape = 'u32[]', space=smem, size = 0x4, offset = 0x4, fixed_abs, tag = 'smem constant byte address 0x4 - core index']
  #allocation1 [shape = 'u32[144,128]{1,0:T(1,128)}', space=vmem, size = 0x12000, scoped, tag = 'internal scratch']
  %s0 = inlined_call_operand.hbm [shape: bf16[2,16,32], index: 0, kind: input, shape index: {}]
  %s1 = inlined_call_operand.hbm [shape: bf16[32,96], index: 1, kind: input, shape index: {}]
  %s2 = inlined_call_operand.vmem [shape: f32[1,96], index: 2, kind: input, shape index: {}]
  %s3 = inlined_call_operand.hbm [shape: bf16[2,16,96], index: 3, kind: output, shape index: {}]
  %s4 = sld [smem:[#allocation0]]
  $region53: #{tpu_custom_call.1} parent=0
    _
  %s6 = ssub.s32 1, %s4
  %s7 = scalar_select 0, %s6, %s4
  $region1: #{tpu_custom_call.1} parent=0
    #allocation2 [shape = 'u8[8192]{0}', space=vmem, size = 0x2000, scoped, tag = 'input window, operand 0']
    #allocation3 [shape = 's32[2]{0}', space=sflag, size = 0x8, scoped, tag = 'scoped memory for tpu_custom_call.1']
    #allocation4 [shape = 's32[2]{0}', space=sflag, size = 0x8, scoped, tag = 'scoped memory for tpu_custom_call.1']
    #allocation5 [shape = 'u8[8192]{0}', space=vmem, size = 0x2000, scoped, tag = 'input window, operand 1, single buffered']
    #allocation6 [shape = 's32[1]{0}', space=sflag, size = 0x4, scoped, tag = 'scoped memory for tpu_custom_call.1']
    #allocation7 [shape = 'u8[8192]{0}', space=vmem, size = 0x2000, scoped, tag = 'output window, operand 0']
    %8 = vsyncpa [#allocation3], 0
    %s9 = scalar_lea.sflag [#allocation3], 1
    %10 = vsyncpa %s9, 0
    %11 = vsyncpa [#allocation6], 0
    %12 = vsyncpa [#allocation4], 0
    %s13 = scalar_lea.sflag [#allocation4], 1
    %14 = vsyncpa %s13, 0
    loop: start=0, step=1, limit=4
    $region2: #{tpu_custom_call.1} parent=1 // loop_pre_header
      _
    $region3: #{tpu_custom_call.1} parent=1 // loop_header
      %s16 = sphi 0, %s20
      %p17 = scmp.ge.s32.totalorder %s16, 4
      %s23 = sphi 0, %s35
      %s24 = sphi 0, %s31
      %s25 = sphi 0, %s23
      %s26 = sphi 0, %s24
      %s27 = sphi 0, %s25
      %s28 = sphi 0, %s26
      %s40 = sphi 0, %s42
      %s43 = sphi 0, %s40
      %s44 = sphi 0, %s43
      %s60 = sphi 0, %s44
      %s64 = sphi 0, %s64
      %s66 = sphi 0, %s64
      %s67 = sphi 0, %s66
      %s81 = sphi 0, %s67
      %s85 = sphi 0, %s85
      %s87 = sphi 0, %s85
      %s88 = sphi 0, %s87
      %s102 = sphi 0, %s88
      %s110 = sphi 0, %s112
      %s113 = sphi 0, %s110
      %s114 = sphi 0, %s113
      %s130 = sphi 0, %s114
    $region4: #{tpu_custom_call.1} parent=1 // loop_header_branch
      %19 = sbr.rel (%p17) target = $region8
    $region5: #{tpu_custom_call.1} parent=1 // loop_body
      %s21 = ssub.s32 %s16, 1
      %s22 = ssub.s32 %s16, 2
      %s29 = sadd.s32 1, %s24
      %p30 = scmp.ge.s32.totalorder %s29, 1
      %s31 = scalar_select %p30, 0, %s29
      %s32 = sadd.s32 1, %s23
      %s33 = scalar_select %p30, %s32, %s23
      %p34 = scmp.ge.s32.totalorder %s33, 2
      %s35 = scalar_select %p34, 0, %s33
      %s36 = ssub.s32 %s23, %s35
      %s37 = ssub.s32 %s24, %s31
      %s38 = sor.u32 %s36, %s37
      %p39 = scmp.eq.s32.totalorder %s38, 0
      %s41 = sadd.s32 %s40, 1
      %s42 = scalar_select %p39, %s40, %s41
      %p45 = pneg %p39
      %p46 = scmp.eq.s32.totalorder %s16, 1
      %p47 = por %p45, %p46
      %p48 = scmp.ne.s32.totalorder %s40, %s43
      %p49 = scmp.eq.s32.totalorder %s16, 0
      %p50 = por %p48, %p49
      %p51 = scmp.ne.s32.totalorder %s40, %s43
      %p52 = scmp.eq.s32.totalorder %s21, 1
      %p53 = por %p51, %p52
      %p54 = scmp.ne.s32.totalorder %s43, %s44
      %p55 = scmp.eq.s32.totalorder %s21, 0
      %p56 = por %p54, %p55
      %p57 = scmp.ne.s32.totalorder %s43, %s44
      %p58 = scmp.eq.s32.totalorder %s22, 1
      %p59 = por %p57, %p58
      %p61 = scmp.ne.s32.totalorder %s44, %s60
      %p62 = scmp.eq.s32.totalorder %s22, 0
      %p63 = por %p61, %p62
      %s65 = sadd.s32 %s64, 1
      %p68 = scmp.eq.s32.totalorder %s16, 1
      %p69 = scmp.ne.s32.totalorder %s64, %s66
      %p70 = scmp.eq.s32.totalorder %s16, 0
      %p71 = por %p69, %p70
      %p72 = scmp.ne.s32.totalorder %s64, %s66
      %p73 = scmp.eq.s32.totalorder %s21, 1
      %p74 = por %p72, %p73
      %p75 = scmp.ne.s32.totalorder %s66, %s67
      %p76 = scmp.eq.s32.totalorder %s21, 0
      %p77 = por %p75, %p76
      %p78 = scmp.ne.s32.totalorder %s66, %s67
      %p79 = scmp.eq.s32.totalorder %s22, 1
      %p80 = por %p78, %p79
      %p82 = scmp.ne.s32.totalorder %s67, %s81
      %p83 = scmp.eq.s32.totalorder %s22, 0
      %p84 = por %p82, %p83
      %s86 = sadd.s32 %s85, 1
      %p89 = scmp.eq.s32.totalorder %s16, 1
      %p90 = scmp.ne.s32.totalorder %s85, %s87
      %p91 = scmp.eq.s32.totalorder %s16, 0
      %p92 = por %p90, %p91
      %p93 = scmp.ne.s32.totalorder %s85, %s87
      %p94 = scmp.eq.s32.totalorder %s21, 1
      %p95 = por %p93, %p94
      %p96 = scmp.ne.s32.totalorder %s87, %s88
      %p97 = scmp.eq.s32.totalorder %s21, 0
      %p98 = por %p96, %p97
      %p99 = scmp.ne.s32.totalorder %s87, %s88
      %p100 = scmp.eq.s32.totalorder %s22, 1
      %p101 = por %p99, %p100
      %p103 = scmp.ne.s32.totalorder %s88, %s102
      %p104 = scmp.eq.s32.totalorder %s22, 0
      %p105 = por %p103, %p104
      %s106 = ssub.s32 %s23, %s35
      %s107 = ssub.s32 %s24, %s31
      %s108 = sor.u32 %s106, %s107
      %p109 = scmp.eq.s32.totalorder %s108, 0
      %s111 = sadd.s32 %s110, 1
      %s112 = scalar_select %p109, %s110, %s111
      %p115 = pneg %p109
      %p116 = scmp.eq.s32.totalorder %s16, 1
      %p117 = por %p115, %p116
      %p118 = scmp.ne.s32.totalorder %s110, %s113
      %p119 = scmp.eq.s32.totalorder %s16, 0
      %p120 = por %p118, %p119
      %p121 = scmp.ne.s32.totalorder %s110, %s113
      %p122 = scmp.eq.s32.totalorder %s21, 1
      %p123 = por %p121, %p122
      %p124 = scmp.ne.s32.totalorder %s113, %s114
      %p125 = scmp.eq.s32.totalorder %s21, 0
      %p126 = por %p124, %p125
      %p127 = scmp.ne.s32.totalorder %s113, %s114
      %p128 = scmp.eq.s32.totalorder %s22, 1
      %p129 = por %p127, %p128
      %p131 = scmp.ne.s32.totalorder %s114, %s130
      %p132 = scmp.eq.s32.totalorder %s22, 0
      %p133 = por %p131, %p132
      %p134 = scmp.le.s32.totalorder 1, %s16
      %p135 = scmp.lt.s32.totalorder %s16, 3
      %p136 = pnand %p134, %p135
      %p137 = pneg %p136
      // Predicated region
      $region9: #{tpu_custom_call.1} parent=5 // pred_check
        _
      $region10: #{tpu_custom_call.1} parent=5 // pred_check_branch
        %139 = sbr.rel (%p136) target = $region12
      $region11: #{tpu_custom_call.1} parent=5 // pred_region
        %s140 = ssub.s32 %s16, 1
        // Predicated region
        $region13: #{tpu_custom_call.1} parent=11 // pred_check
          %p141 = pneg %p77
        $region14: #{tpu_custom_call.1} parent=11 // pred_check_branch
          %143 = sbr.rel (%p141) target = $region16
        $region15: #{tpu_custom_call.1} parent=11 // pred_region
          %s145 = ssub.s32 256, 256
          %146 = vsyncadd [#allocation6], %s145
          %s147 = sshll.u32 [#allocation5], 4
          %s148 = int_to_ptr.vmem [resolvable:$true] %s147
          %153 = dma.hbm_to_vmem [thread:$0]  %s1, 256, %s148, [#allocation6], 64, 64, 4
        $region16: #{tpu_custom_call.1} parent=11 // pred_fallthru
          _
        // Predicated region
        $region17: #{tpu_custom_call.1} parent=11 // pred_check
          %p154 = pneg %p98
        $region18: #{tpu_custom_call.1} parent=11 // pred_check_branch
          %156 = sbr.rel (%p154) target = $region20
        $region19: #{tpu_custom_call.1} parent=11 // pred_region
          _
        $region20: #{tpu_custom_call.1} parent=11 // pred_fallthru
          _
      $region12: #{tpu_custom_call.1} parent=5 // pred_fallthru
        _
      %p157 = scmp.lt.s32.totalorder %s16, 2
      // Predicated region
      $region21: #{tpu_custom_call.1} parent=5 // pred_check
        %p158 = pneg %p157
      $region22: #{tpu_custom_call.1} parent=5 // pred_check_branch
        %160 = sbr.rel (%p158) target = $region24
      $region23: #{tpu_custom_call.1} parent=5 // pred_region
        // Predicated region
        $region25: #{tpu_custom_call.1} parent=23 // pred_check
          %p161 = pneg %p50
        $region26: #{tpu_custom_call.1} parent=23 // pred_check_branch
          %163 = sbr.rel (%p161) target = $region28
        $region27: #{tpu_custom_call.1} parent=23 // pred_region
          %s164 = sand.u32 %s40, 1
          %s165 = scalar_lea.sflag [#allocation3], %s164
          %s166 = sand.u32 %s40, 1
          %s167 = smul.addr %s166, 8
          %s168 = scalar_lea.vmem [#allocation2], %s167
          %s169 = smul.u32 2, %s24
          %s171 = ssub.s32 128, 128
          %172 = vsyncadd %s165, %s171
          %s173 = smul.addr %s23, 2
          %s174 = sadd.s32 %s169, %s173
          %s175 = smul.addr %s174, 64
          %s176 = scalar_lea.hbm %s0, %s175
          %s177 = sshll.u32 %s168, 4
          %s178 = int_to_ptr.vmem [resolvable:$true] %s177
          %183 = dma.hbm_to_vmem [thread:$0]  %s176, 128, %s178, %s165, 64, 64, 4
        $region28: #{tpu_custom_call.1} parent=23 // pred_fallthru
          _
      $region24: #{tpu_custom_call.1} parent=5 // pred_fallthru
        _
      %p184 = scmp.le.s32.totalorder 1, %s16
      %p185 = scmp.lt.s32.totalorder %s16, 3
      %p186 = pnand %p184, %p185
      %p187 = pneg %p186
      // Predicated region
      $region29: #{tpu_custom_call.1} parent=5 // pred_check
        _
      $region30: #{tpu_custom_call.1} parent=5 // pred_check_branch
        %189 = sbr.rel (%p186) target = $region32
      $region31: #{tpu_custom_call.1} parent=5 // pred_region
        %s190 = ssub.s32 %s16, 1
        %s191 = sand.u32 %s43, 1
        %s192 = scalar_lea.sflag [#allocation3], %s191
        %s193 = sand.u32 %s43, 1
        %s194 = smul.addr %s193, 8
        %s195 = scalar_lea.vmem [#allocation2], %s194
        // Predicated region
        $region33: #{tpu_custom_call.1} parent=31 // pred_check
          %p196 = pneg %p56
        $region34: #{tpu_custom_call.1} parent=31 // pred_check_branch
          %198 = sbr.rel (%p196) target = $region36
        $region35: #{tpu_custom_call.1} parent=31 // pred_region
          %199 = dma.done %s192, 128
        $region36: #{tpu_custom_call.1} parent=31 // pred_fallthru
          _
        // Predicated region
        $region37: #{tpu_custom_call.1} parent=31 // pred_check
          %p200 = pneg %p77
        $region38: #{tpu_custom_call.1} parent=31 // pred_check_branch
          %202 = sbr.rel (%p200) target = $region40
        $region39: #{tpu_custom_call.1} parent=31 // pred_region
          %203 = dma.done [#allocation6], 256
        $region40: #{tpu_custom_call.1} parent=31 // pred_fallthru
          _
        %s204 = sand.u32 %s43, 1
        %s205 = scalar_lea.sflag [#allocation3], %s204
        %s206 = sand.u32 %s43, 1
        %s207 = smul.addr %s206, 8
        %s208 = scalar_lea.vmem [#allocation2], %s207
        %p209 = pneg %p56
        %p210 = pneg %p53
        %p211 = pneg %p77
        %p212 = pneg %p74
        %p213 = pneg %p98
        %p214 = pneg %p95
        %p215 = pneg %p126
        %p216 = pneg %p123
        %s217 = sand.u32 %s113, 1
        %s218 = scalar_lea.sflag [#allocation4], %s217
        %s219 = sand.u32 %s113, 1
        %s220 = smul.addr %s219, 8
        %s221 = scalar_lea.vmem [#allocation7], %s220
        %s222 = smul.u32 2, %s26
        %s223 = smul.u32 2, %s26
        %v225 = vld [vmem:[%s195] sm:$0xf]
        %v226 = vld [vmem:[%s195 + $0x4] sm:$0xf]
        %v227 = vld [vmem:[#allocation5] sm:$0xf]
        %v228 = vld [vmem:[#allocation5 + $0x4] sm:$0xf]
        %v229 = vld [vmem:[#allocation5 + $0x8] sm:$0xf]
        %v230 = vld [vmem:[#allocation5 + $0xc] sm:$0xf]
        %v231 = vld [vmem:[%s2] sm:$0x1]
        %v233 = vlaneseq
        %v234 = vshrl.u32 %v233, 7
        %v235 = vsub.s32 0, %v234
        %v236 = vrot.slane %v231, %v235
        %v240 = vunpack.c.l.b16 %v225
        %v241 = vunpack.c.l.b16 %v226
        %v242 = vpack.c.b16 %v241, %v240
        %v247 = vunpack.c.l.b16 %v227
        %v248 = vunpack.c.l.b16 %v228
        %v249 = vunpack.c.l.b16 %v229
        %v250 = vunpack.c.l.b16 %v230
        %v251 = vpack.c.b16 %v248, %v247
        %v252 = vpack.c.b16 %v250, %v249
        %vm255 = vcmask 261120
        %v257 = vsel %vm255, %v242, 0
        %259 = vmatprep.subr.bf16.mxu0 0
        %260 = vmatpush1.bf16.msra.mxu0 %v251
        %261 = vmatprep.subr.bf16.mxu0 0
        %262 = vmatpush1.bf16.msra.mxu0 %v252
        %263 = vmatprep.subr.bf16.mxu0 0
        %264 = vmatpush1.bf16.msra.mxu0 0
        %265 = vmatprep.subr.bf16.mxu0 0
        %266 = vmatpush1.bf16.msra.mxu0 0
        %267 = vmatprep.subr.bf16.mxu0 0
        %268 = vmatpush1.bf16.msra.mxu0 0
        %269 = vmatprep.subr.bf16.mxu0 0
        %270 = vmatpush1.bf16.msra.mxu0 0
        %271 = vmatprep.subr.bf16.mxu0 0
        %272 = vmatpush1.bf16.msra.mxu0 0
        %273 = vmatprep.subr.bf16.mxu0 0
        %274 = vmatpush1.bf16.msra.mxu0 0
        %275 = vmatprep.subr.bf16.mxu0 0
        %276 = vmatpush1.bf16.msra.mxu0 0
        %277 = vmatprep.subr.bf16.mxu0 0
        %278 = vmatpush1.bf16.msra.mxu0 0
        %279 = vmatprep.subr.bf16.mxu0 0
        %280 = vmatpush1.bf16.msra.mxu0 0
        %281 = vmatprep.subr.bf16.mxu0 0
        %282 = vmatpush1.bf16.msra.mxu0 0
        %283 = vmatprep.subr.bf16.mxu0 0
        %284 = vmatpush1.bf16.msra.mxu0 0
        %285 = vmatprep.subr.bf16.mxu0 0
        %286 = vmatpush1.bf16.msra.mxu0 0
        %287 = vmatprep.subr.bf16.mxu0 0
        %288 = vmatpush1.bf16.msra.mxu0 0
        %289 = vmatprep.subr.bf16.mxu0 0
        %290 = vmatpush1.bf16.msra.mxu0 0
        %291 = vmatprep.mubr.bf16.mxu0 0
        %292 = vmatmul.mubr.bf16.gmra.mrb[0].mxu0 %v257
        %v293 = vpop.f32.mrb[0].mxu0
        %v294 = vadd.f32 %v236, %v293
        %v295 = vpop.f32.mrb[0].mxu0
        %v296 = vpop.f32.mrb[0].mxu0
        %v297 = vadd.f32 %v236, %v296
        %v298 = vpop.f32.mrb[0].mxu0
        %299 = vdwg.mxu0
        %v300 = vpack.c.bf16 %v297, %v294
        %v302 = vunpack.c.l.b16 %v300
        %v303 = vunpack.c.h.b16 %v300
        %v304 = vpack.c.b16 %v302, %v302
        %v305 = vpack.c.b16 %v303, %v303
        %vm308 = vcmask 781312
        %309 = vst.msk [vmem:[%s221] sm:$0xf] %vm308, %v304
        %310 = vst.msk [vmem:[%s221 + $0x4] sm:$0xf] %vm308, %v305
        %s311 = sand.u32 %s113, 1
        %s312 = scalar_lea.sflag [#allocation4], %s311
        %s313 = sand.u32 %s113, 1
        %s314 = smul.addr %s313, 8
        %s315 = scalar_lea.vmem [#allocation7], %s314
        // Predicated region
        $region41: #{tpu_custom_call.1} parent=31 // pred_check
          %p316 = pneg %p123
        $region42: #{tpu_custom_call.1} parent=31 // pred_check_branch
          %318 = sbr.rel (%p316) target = $region44
        $region43: #{tpu_custom_call.1} parent=31 // pred_region
          %s319 = smul.u32 2, %s26
          %s321 = ssub.s32 128, 128
          %322 = vsyncadd %s312, %s321
          %s323 = smul.addr %s25, 2
          %s324 = sadd.s32 %s319, %s323
          %s325 = smul.addr %s324, 64
          %s326 = scalar_lea.hbm %s3, %s325
          %s327 = sshll.u32 %s315, 4
          %s328 = int_to_ptr.vmem [resolvable:$true] %s327
          %333 = dma.vmem_to_hbm [thread:$0]  %s328, 128, %s326, %s312, 64, 64, 4
        $region44: #{tpu_custom_call.1} parent=31 // pred_fallthru
          _
      $region32: #{tpu_custom_call.1} parent=5 // pred_fallthru
        _
      %p334 = scmp.le.s32.totalorder 2, %s16
      // Predicated region
      $region45: #{tpu_custom_call.1} parent=5 // pred_check
        %p335 = pneg %p334
      $region46: #{tpu_custom_call.1} parent=5 // pred_check_branch
        %337 = sbr.rel (%p335) target = $region48
      $region47: #{tpu_custom_call.1} parent=5 // pred_region
        %s338 = ssub.s32 %s16, 2
        // Predicated region
        $region49: #{tpu_custom_call.1} parent=47 // pred_check
          %p339 = pneg %p129
        $region50: #{tpu_custom_call.1} parent=47 // pred_check_branch
          %341 = sbr.rel (%p339) target = $region52
        $region51: #{tpu_custom_call.1} parent=47 // pred_region
          %s342 = sand.u32 %s114, 1
          %s343 = scalar_lea.sflag [#allocation4], %s342
          %s344 = sand.u32 %s114, 1
          %s345 = smul.addr %s344, 8
          %s346 = scalar_lea.vmem [#allocation7], %s345
          %347 = dma.done %s343, 128
        $region52: #{tpu_custom_call.1} parent=47 // pred_fallthru
          _
      $region48: #{tpu_custom_call.1} parent=5 // pred_fallthru
        _
    $region6: #{tpu_custom_call.1} parent=1 // loop_footer
      %s20 = sadd.s32 1, %s16
    $region7: #{tpu_custom_call.1} parent=1 // loop_footer_branch
      %15 = sbr.rel target = $region3
    $region8: #{tpu_custom_call.1} parent=1 // loop_exit
      _
    %348 = vsyncpa [#allocation3], 1
    %s349 = scalar_lea.sflag [#allocation3], 1
    %350 = vsyncpa %s349, 1
    %351 = vsyncpa [#allocation6], 1
    %352 = vsyncpa [#allocation4], 1
    %s353 = scalar_lea.sflag [#allocation4], 1
    %354 = vsyncpa %s353, 1

</llo_original>
